<compile_context>
chip_gen: v7x
topology: tpu7x:2x2x1
jax: 0.10.0
libtpu: 0.0.40
codegen_flags: <defaults>
</compile_context>

<pallas_src>
import math

import jax
import jax.numpy as jnp
from jax import lax
from jax.experimental import pallas as pl
from jax.experimental.pallas import tpu as pltpu

# ----------------------------- hyperparameters -----------------------------
D = 32            # input/output dim
DFF = 4 * D       # inner dim (128 -> lane-dense intermediate)
BATCH = 2
SEQ = 8


# ----------------------------- Pallas kernel -----------------------------
def ffn_kernel(x_ref, w_ref, b_ref, o_ref):
    """Fused FFN: o = GELU(x @ W1 + b1) @ W2 + b2.

    x_ref / o_ref : (B*S, d)
    w_ref         : (2*d, dff)  -- rows [0, d) = W1, rows [d, 2d) = W2^T
    b_ref         : (1, dff+d)  -- cols [0, dff) = b1, cols [dff, dff+d) = b2

    Single invocation (no grid): one dispatch, three input DMAs, and the
    (B*S, dff) hidden activation never round-trips to HBM.
    """
    x = x_ref[...]                           # (N, d)
    w1 = w_ref[:D, :]                        # (d, dff)   static slice, free
    w2t = w_ref[D:, :]                       # (d, dff)   == W2^T, lane-dense
    b1 = b_ref[:, :DFF]                      # (1, dff)
    b2 = b_ref[:, DFF:]                      # (1, d)

    h = jnp.dot(x, w1, preferred_element_type=jnp.float32) + b1      # (N, dff)
    # nn.Dropout(p=0) == identity (use_dropout=False default).
    # PyTorch nn.GELU() default = exact erf form; keep the math in f32.
    h = 0.5 * h * (1.0 + lax.erf(h * (1.0 / math.sqrt(2.0))))        # (N, dff)

    # Second linear with W2 stored transposed: contract over the last dims
    # (trans_b form) -> (N, d). MXU takes the transposed operand natively.
    o = lax.dot_general(
        h, w2t,
        dimension_numbers=(((1,), (1,)), ((), ())),
        preferred_element_type=jnp.float32,
    ) + b2
    o_ref[...] = o.astype(o_ref.dtype)


# ----------------------------- host-side wrapper -----------------------------
def pack_params(w1, b1, w2, b2):
    """One-time host-side packing: 6 input DMAs -> 3.

    W2 is stored transposed (d, dff) so the kernel never holds a lane-padded
    (dff, d) tile; biases are co-located in a single (1, dff+d) buffer.
    """
    w_packed = jnp.concatenate([w1, w2.T], axis=0)      # (2d, dff)
    b_packed = jnp.concatenate([b1, b2], axis=1)        # (1, dff + d)
    return w_packed, b_packed


def feed_forward(x, w_packed, b_packed):
    B, S, d = x.shape
    x2 = x.reshape(B * S, d)   # fold batch+seq into the sublane axis: (16, 32)

    vmem = pl.BlockSpec(memory_space=pltpu.MemorySpace.VMEM)
    out = pl.pallas_call(
        ffn_kernel,
        out_shape=jax.ShapeDtypeStruct((B * S, d), jnp.float32),
        in_specs=[vmem, vmem, vmem],
        out_specs=vmem,
    )(x2, w_packed, b_packed)

    return out.reshape(B, S, d)


# ----------------------------- parameters -----------------------------
def init_params(key, d, dff):
    """Deterministic synthetic parameters (layout: x @ W, equivalent to nn.Linear)."""
    k1, k2, k3, k4 = jax.random.split(key, 4)
    w1 = jax.random.normal(k1, (d, dff), jnp.float32) * (1.0 / math.sqrt(d))
    b1 = jax.random.normal(k2, (1, dff), jnp.float32) * 0.01
    w2 = jax.random.normal(k3, (dff, d), jnp.float32) * (1.0 / math.sqrt(dff))
    b2 = jax.random.normal(k4, (1, d), jnp.float32) * 0.01
    return w1, b1, w2, b2


# ----------------------------- pure-JAX reference -----------------------------
def _reference_forward(x, w1, b1, w2, b2):
    h = jax.nn.gelu(x @ w1 + b1, approximate=False)   # exact erf GELU
    return h @ w2 + b2


# ----------------------------- main -----------------------------
if __name__ == "__main__":
    key = jax.random.PRNGKey(0)
    k_x, k_p = jax.random.split(key)

    x = jax.random.normal(k_x, (BATCH, SEQ, D), jnp.float32)
    w1, b1, w2, b2 = init_params(k_p, D, DFF)
    w_packed, b_packed = pack_params(w1, b1, w2, b2)

    out = feed_forward(x, w_packed, b_packed)
    out = jax.block_until_ready(out)

    ref = _reference_forward(x, w1, b1, w2, b2)
    assert out.shape == (BATCH, SEQ, D)
    assert jnp.allclose(out, ref, rtol=1e-4, atol=1e-5), "mismatch vs pure-JAX reference"

    print("KERNEL_OK")
</pallas_src>

<mosaic_0001>
module attributes {stable_mosaic.version = 11 : i64} {
  func.func @ffn_kernel(%arg0: memref<16x32xf32, #tpu.memory_space<vmem>>, %arg1: memref<64x128xf32, #tpu.memory_space<vmem>>, %arg2: memref<1x160xf32, #tpu.memory_space<vmem>>, %arg3: memref<16x32xf32, #tpu.memory_space<vmem>>) attributes {dimension_semantics = [], scalar_prefetch = 0 : i64, scratch_operands = 0 : i64, tpu.core_type = #tpu.core_type<tc>} {
    %c0 = arith.constant 0 : index
    %c0_0 = arith.constant 0 : index
    %0 = vector.load %arg0[%c0, %c0_0] : memref<16x32xf32, #tpu.memory_space<vmem>>, vector<16x32xf32>
    %c0_1 = arith.constant 0 : index
    %c0_2 = arith.constant 0 : index
    %1 = vector.load %arg1[%c0_1, %c0_2] : memref<64x128xf32, #tpu.memory_space<vmem>>, vector<32x128xf32>
    %c32 = arith.constant 32 : index
    %c0_3 = arith.constant 0 : index
    %2 = vector.load %arg1[%c32, %c0_3] : memref<64x128xf32, #tpu.memory_space<vmem>>, vector<32x128xf32>
    %c0_4 = arith.constant 0 : index
    %c0_5 = arith.constant 0 : index
    %3 = vector.load %arg2[%c0_4, %c0_5] : memref<1x160xf32, #tpu.memory_space<vmem>>, vector<1x128xf32>
    %c0_6 = arith.constant 0 : index
    %c128 = arith.constant 128 : index
    %4 = vector.load %arg2[%c0_6, %c128] : memref<1x160xf32, #tpu.memory_space<vmem>>, vector<1x32xf32>
    %cst = arith.constant dense<0.000000e+00> : vector<16x128xf32>
    %5 = tpu.matmul %0, %1, %cst {dimension_numbers = #tpu.dot_dimension_numbers<[1], [0], [0], [1], [0, 0, 1, 1], [], []>} : vector<16x32xf32>, vector<32x128xf32>, vector<16x128xf32> -> vector<16x128xf32>
    %6 = vector.broadcast %3 : vector<1x128xf32> to vector<16x128xf32>
    %7 = arith.addf %5, %6 : vector<16x128xf32>
    %cst_7 = arith.constant 5.000000e-01 : f32
    %8 = vector.broadcast %cst_7 : f32 to vector<16x128xf32>
    %9 = arith.mulf %8, %7 : vector<16x128xf32>
    %cst_8 = arith.constant 0.707106769 : f32
    %10 = vector.broadcast %cst_8 : f32 to vector<16x128xf32>
    %11 = arith.mulf %7, %10 : vector<16x128xf32>
    %12 = math.erf %11 : vector<16x128xf32>
    %cst_9 = arith.constant 1.000000e+00 : f32
    %13 = vector.broadcast %cst_9 : f32 to vector<16x128xf32>
    %14 = arith.addf %13, %12 : vector<16x128xf32>
    %15 = arith.mulf %9, %14 : vector<16x128xf32>
    %cst_10 = arith.constant dense<0.000000e+00> : vector<16x32xf32>
    %16 = tpu.matmul %15, %2, %cst_10 {dimension_numbers = #tpu.dot_dimension_numbers<[1], [1], [0], [0], [0, 0, 1, 0], [], []>} : vector<16x128xf32>, vector<32x128xf32>, vector<16x32xf32> -> vector<16x32xf32>
    %17 = vector.broadcast %4 : vector<1x32xf32> to vector<16x32xf32>
    %18 = arith.addf %16, %17 : vector<16x32xf32>
    %c0_11 = arith.constant 0 : index
    %c0_12 = arith.constant 0 : index
    %19 = vector.load %arg3[%c0_11, %c0_12] : memref<16x32xf32, #tpu.memory_space<vmem>>, vector<16x32xf32>
    tpu.vector_store %arg3[%c0_11, %c0_12], %18 {strides = array<i32>} : memref<16x32xf32, #tpu.memory_space<vmem>>, vector<16x32xf32>,
    return
  }
}

</mosaic_0001>

<llo_original>
// kernel: tpu_custom_call.1
$region0: #{tpu_custom_call.1}
  #allocation0 [shape = 'u32[]', space=smem, size = 0x4, offset = 0x4, fixed_abs, tag = 'smem constant byte address 0x4 - core index']
  #allocation1 [shape = 'u32[144,128]{1,0:T(1,128)}', space=vmem, size = 0x12000, scoped, tag = 'internal scratch']
  %s0 = inlined_call_operand.hbm [shape: f32[16,32], index: 0, kind: input, shape index: {}]
  %s1 = inlined_call_operand.hbm [shape: f32[64,128], index: 1, kind: input, shape index: {}]
  %s2 = inlined_call_operand.vmem [shape: f32[1,160], index: 2, kind: input, shape index: {}]
  %s3 = inlined_call_operand.hbm [shape: f32[16,32], index: 3, kind: output, shape index: {}]
  %s4 = sld [smem:[#allocation0]]
  $region30: #{tpu_custom_call.1} parent=0
    _
  %s6 = ssub.s32 1, %s4
  %s7 = scalar_select 0, %s6, %s4
  $region1: #{tpu_custom_call.1} parent=0
    #allocation2 [shape = 'u8[8192]{0}', space=vmem, size = 0x2000, scoped, tag = 'input window, operand 0, single buffered']
    #allocation3 [shape = 's32[1]{0}', space=sflag, size = 0x4, scoped, tag = 'scoped memory for tpu_custom_call.1']
    #allocation4 [shape = 's32[1]{0}', space=sflag, size = 0x4, scoped, tag = 'scoped memory for tpu_custom_call.1']
    #allocation5 [shape = 'u8[32768]{0}', space=vmem, size = 0x8000, scoped, tag = 'input window, operand 1, single buffered']
    #allocation6 [shape = 's32[1]{0}', space=sflag, size = 0x4, scoped, tag = 'scoped memory for tpu_custom_call.1']
    #allocation7 [shape = 'u8[8192]{0}', space=vmem, size = 0x2000, scoped, tag = 'output window, operand 0, single buffered']
    %8 = vsyncpa [#allocation3], 0
    %9 = vsyncpa [#allocation6], 0
    %10 = vsyncpa [#allocation4], 0
    // Predicated region
    $region2: #{tpu_custom_call.1} parent=1 // pred_check
      _
    $region3: #{tpu_custom_call.1} parent=1 // pred_check_branch
      %12 = sbr.rel (0) target = $region5
    $region4: #{tpu_custom_call.1} parent=1 // pred_region
      %s14 = ssub.s32 256, 256
      %15 = vsyncadd [#allocation3], %s14
      %s16 = sshll.u32 [#allocation2], 4
      %s17 = int_to_ptr.vmem [resolvable:$true] %s16
      %22 = dma.hbm_to_vmem [thread:$0]  %s0, 256, %s17, [#allocation3], 128, 128, 8
    $region5: #{tpu_custom_call.1} parent=1 // pred_fallthru
      _
    // Predicated region
    $region6: #{tpu_custom_call.1} parent=1 // pred_check
      _
    $region7: #{tpu_custom_call.1} parent=1 // pred_check_branch
      %24 = sbr.rel (0) target = $region9
    $region8: #{tpu_custom_call.1} parent=1 // pred_region
      %s26 = ssub.s32 1024, 1024
      %27 = vsyncadd [#allocation6], %s26
      %s28 = sshll.u32 [#allocation5], 4
      %s29 = int_to_ptr.vmem [resolvable:$true] %s28
      %34 = dma.hbm_to_vmem [thread:$0]  %s1, 1024, %s29, [#allocation6], 128, 128, 8
    $region9: #{tpu_custom_call.1} parent=1 // pred_fallthru
      _
    // Predicated region
    $region10: #{tpu_custom_call.1} parent=1 // pred_check
      _
    $region11: #{tpu_custom_call.1} parent=1 // pred_check_branch
      %36 = sbr.rel (0) target = $region13
    $region12: #{tpu_custom_call.1} parent=1 // pred_region
      _
    $region13: #{tpu_custom_call.1} parent=1 // pred_fallthru
      _
    // Predicated region
    $region14: #{tpu_custom_call.1} parent=1 // pred_check
      _
    $region15: #{tpu_custom_call.1} parent=1 // pred_check_branch
      %38 = sbr.rel (0) target = $region17
    $region16: #{tpu_custom_call.1} parent=1 // pred_region
      %39 = dma.done [#allocation3], 256
    $region17: #{tpu_custom_call.1} parent=1 // pred_fallthru
      _
    // Predicated region
    $region18: #{tpu_custom_call.1} parent=1 // pred_check
      _
    $region19: #{tpu_custom_call.1} parent=1 // pred_check_branch
      %41 = sbr.rel (0) target = $region21
    $region20: #{tpu_custom_call.1} parent=1 // pred_region
      %42 = dma.done [#allocation6], 1024
    $region21: #{tpu_custom_call.1} parent=1 // pred_fallthru
      _
    %v43 = vld [vmem:[#allocation2] sm:$0xff]
    %v44 = vld [vmem:[#allocation2 + $0x8] sm:$0xff]
    %v45 = vld [vmem:[#allocation5] sm:$0xff]
    %v46 = vld [vmem:[#allocation5 + $0x8] sm:$0xff]
    %v47 = vld [vmem:[#allocation5 + $0x10] sm:$0xff]
    %v48 = vld [vmem:[#allocation5 + $0x18] sm:$0xff]
    %v49 = vld [vmem:[#allocation5 + $0x20] sm:$0xff]
    %v50 = vld [vmem:[#allocation5 + $0x28] sm:$0xff]
    %v51 = vld [vmem:[#allocation5 + $0x30] sm:$0xff]
    %v52 = vld [vmem:[#allocation5 + $0x38] sm:$0xff]
    %v53 = vld [vmem:[%s2] sm:$0x1]
    %v54 = vld [vmem:[%s2 + $0x1] sm:$0x1]
    %v56 = vlaneseq
    %v57 = vshrl.u32 %v56, 7
    %v58 = vsub.s32 0, %v57
    %v59 = vrot.slane %v53, %v58
    %vm61 = vcmask 261120
    %v63 = vsel %vm61, %v43, 0
    %v66 = vsel %vm61, %v44, 0
    %68 = vmatprep.subr.mxu0 0.0
    %69 = vmatpush1.msra.mxu0 %v45
    %70 = vmatprep.subr.mxu0 0.0
    %71 = vmatpush1.msra.mxu0 %v46
    %72 = vmatprep.subr.mxu0 0.0
    %73 = vmatpush1.msra.mxu0 %v47
    %74 = vmatprep.subr.mxu0 0.0
    %75 = vmatpush1.msra.mxu0 %v48
    %76 = vmatprep.subr.mxu0 0.0
    %77 = vmatpush1.msra.mxu0 0.0
    %78 = vmatprep.subr.mxu0 0.0
    %79 = vmatpush1.msra.mxu0 0.0
    %80 = vmatprep.subr.mxu0 0.0
    %81 = vmatpush1.msra.mxu0 0.0
    %82 = vmatprep.subr.mxu0 0.0
    %83 = vmatpush1.msra.mxu0 0.0
    %84 = vmatprep.subr.mxu0 0.0
    %85 = vmatpush1.msra.mxu0 0.0
    %86 = vmatprep.subr.mxu0 0.0
    %87 = vmatpush1.msra.mxu0 0.0
    %88 = vmatprep.subr.mxu0 0.0
    %89 = vmatpush1.msra.mxu0 0.0
    %90 = vmatprep.subr.mxu0 0.0
    %91 = vmatpush1.msra.mxu0 0.0
    %92 = vmatprep.subr.mxu0 0.0
    %93 = vmatpush1.msra.mxu0 0.0
    %94 = vmatprep.subr.mxu0 0.0
    %95 = vmatpush1.msra.mxu0 0.0
    %96 = vmatprep.subr.mxu0 0.0
    %97 = vmatpush1.msra.mxu0 0.0
    %98 = vmatprep.subr.mxu0 0.0
    %99 = vmatpush1.msra.mxu0 0.0
    %100 = vmatprep.subr.mxu0 0.0
    %101 = vmatpush1.msra.mxu0 0.0
    %102 = vmatprep.subr.mxu0 0.0
    %103 = vmatpush1.msra.mxu0 0.0
    %104 = vmatprep.subr.mxu0 0.0
    %105 = vmatpush1.msra.mxu0 0.0
    %106 = vmatprep.subr.mxu0 0.0
    %107 = vmatpush1.msra.mxu0 0.0
    %108 = vmatprep.subr.mxu0 0.0
    %109 = vmatpush1.msra.mxu0 0.0
    %110 = vmatprep.subr.mxu0 0.0
    %111 = vmatpush1.msra.mxu0 0.0
    %112 = vmatprep.subr.mxu0 0.0
    %113 = vmatpush1.msra.mxu0 0.0
    %114 = vmatprep.subr.mxu0 0.0
    %115 = vmatpush1.msra.mxu0 0.0
    %116 = vmatprep.subr.mxu0 0.0
    %117 = vmatpush1.msra.mxu0 0.0
    %118 = vmatprep.subr.mxu0 0.0
    %119 = vmatpush1.msra.mxu0 0.0
    %120 = vmatprep.subr.mxu0 0.0
    %121 = vmatpush1.msra.mxu0 0.0
    %122 = vmatprep.subr.mxu0 0.0
    %123 = vmatpush1.msra.mxu0 0.0
    %124 = vmatprep.subr.mxu0 0.0
    %125 = vmatpush1.msra.mxu0 0.0
    %126 = vmatprep.subr.mxu0 0.0
    %127 = vmatpush1.msra.mxu0 0.0
    %128 = vmatprep.subr.mxu0 0.0
    %129 = vmatpush1.msra.mxu0 0.0
    %130 = vmatprep.subr.mxu0 0.0
    %131 = vmatpush1.msra.mxu0 0.0
    %132 = vmatprep.mubr.f32.mxu0 0.0
    %133 = vmatmul.mubr.f32.gmra.mrb[0].mxu0 %v63
    %v134 = vpop.f32.mrb[0].mxu0
    %v135 = vadd.f32 %v59, %v134
    %v136 = vpop.f32.mrb[0].mxu0
    %137 = vmatprep.mubr.f32.mxu0 0.0
    %138 = vmatmul.mubr.f32.gmra.mrb[0].mxu0 %v66
    %v139 = vpop.f32.mrb[0].mxu0
    %v140 = vadd.f32 %v59, %v139
    %v141 = vpop.f32.mrb[0].mxu0
    %142 = vdwg.mxu0
    %v143 = vmul.f32 %v135, 0.5
    %v144 = vmul.f32 %v140, 0.5
    %v145 = vmul.f32 %v135, 0.70710677
    %v146 = vmul.f32 %v140, 0.70710677
    %v147 = verf.f32.pop %v145
    %v148 = verf.f32.pop %v146
    %v149 = vadd.f32 %v147, 1.0
    %v150 = vadd.f32 %v148, 1.0
    %v151 = vmul.f32 %v143, %v149
    %v152 = vmul.f32 %v144, %v150
    %v154 = vlaneseq
    %v155 = vshrl.u32 %v154, 7
    %v156 = vsub.s32 0, %v155
    %v157 = vrot.slane %v54, %v156
    %159 = vmatprep.subr.mxu0 0.0
    %160 = vmatpush1.xpose.msra.mxu0 %v49
    %161 = vmatprep.subr.mxu0 0.0
    %162 = vmatpush1.xpose.msra.mxu0 %v50
    %163 = vmatprep.subr.mxu0 0.0
    %164 = vmatpush1.xpose.msra.mxu0 %v51
    %165 = vmatprep.subr.mxu0 0.0
    %166 = vmatpush1.xpose.msra.mxu0 %v52
    %167 = vmatprep.subr.mxu0 0.0
    %168 = vmatpush1.xpose.msra.mxu0 0.0
    %169 = vmatprep.subr.mxu0 0.0
    %170 = vmatpush1.xpose.msra.mxu0 0.0
    %171 = vmatprep.subr.mxu0 0.0
    %172 = vmatpush1.xpose.msra.mxu0 0.0
    %173 = vmatprep.subr.mxu0 0.0
    %174 = vmatpush1.xpose.msra.mxu0 0.0
    %175 = vmatprep.subr.mxu0 0.0
    %176 = vmatpush1.xpose.msra.mxu0 0.0
    %177 = vmatprep.subr.mxu0 0.0
    %178 = vmatpush1.xpose.msra.mxu0 0.0
    %179 = vmatprep.subr.mxu0 0.0
    %180 = vmatpush1.xpose.msra.mxu0 0.0
    %181 = vmatprep.subr.mxu0 0.0
    %182 = vmatpush1.xpose.msra.mxu0 0.0
    %183 = vmatprep.subr.mxu0 0.0
    %184 = vmatpush1.xpose.msra.mxu0 0.0
    %185 = vmatprep.subr.mxu0 0.0
    %186 = vmatpush1.xpose.msra.mxu0 0.0
    %187 = vmatprep.subr.mxu0 0.0
    %188 = vmatpush1.xpose.msra.mxu0 0.0
    %189 = vmatprep.subr.mxu0 0.0
    %190 = vmatpush1.xpose.msra.mxu0 0.0
    %191 = vmatprep.subr.mxu0 0.0
    %192 = vmatpush1.xpose.msra.mxu0 0.0
    %193 = vmatprep.subr.mxu0 0.0
    %194 = vmatpush1.xpose.msra.mxu0 0.0
    %195 = vmatprep.subr.mxu0 0.0
    %196 = vmatpush1.xpose.msra.mxu0 0.0
    %197 = vmatprep.subr.mxu0 0.0
    %198 = vmatpush1.xpose.msra.mxu0 0.0
    %199 = vmatprep.subr.mxu0 0.0
    %200 = vmatpush1.xpose.msra.mxu0 0.0
    %201 = vmatprep.subr.mxu0 0.0
    %202 = vmatpush1.xpose.msra.mxu0 0.0
    %203 = vmatprep.subr.mxu0 0.0
    %204 = vmatpush1.xpose.msra.mxu0 0.0
    %205 = vmatprep.subr.mxu0 0.0
    %206 = vmatpush1.xpose.msra.mxu0 0.0
    %207 = vmatprep.subr.mxu0 0.0
    %208 = vmatpush1.xpose.msra.mxu0 0.0
    %209 = vmatprep.subr.mxu0 0.0
    %210 = vmatpush1.xpose.msra.mxu0 0.0
    %211 = vmatprep.subr.mxu0 0.0
    %212 = vmatpush1.xpose.msra.mxu0 0.0
    %213 = vmatprep.subr.mxu0 0.0
    %214 = vmatpush1.xpose.msra.mxu0 0.0
    %215 = vmatprep.subr.mxu0 0.0
    %216 = vmatpush1.xpose.msra.mxu0 0.0
    %217 = vmatprep.subr.mxu0 0.0
    %218 = vmatpush1.xpose.msra.mxu0 0.0
    %219 = vmatprep.subr.mxu0 0.0
    %220 = vmatpush1.xpose.msra.mxu0 0.0
    %221 = vmatprep.subr.mxu0 0.0
    %222 = vmatpush1.xpose.msra.mxu0 0.0
    %223 = vmatprep.mubr.f32.mxu0 0.0
    %224 = vmatmul.mubr.f32.gmra.mrb[0].mxu0 %v151
    %v225 = vpop.f32.mrb[0].mxu0
    %v226 = vadd.f32 %v157, %v225
    %v227 = vpop.f32.mrb[0].mxu0
    %228 = vmatprep.mubr.f32.mxu0 0.0
    %229 = vmatmul.mubr.f32.gmra.mrb[0].mxu0 %v152
    %v230 = vpop.f32.mrb[0].mxu0
    %v231 = vadd.f32 %v157, %v230
    %v232 = vpop.f32.mrb[0].mxu0
    %233 = vdwg.mxu0
    %234 = vst.msk [vmem:[#allocation7] sm:$0xff] %vm61, %v226
    %235 = vst.msk [vmem:[#allocation7 + $0x8] sm:$0xff] %vm61, %v231
    // Predicated region
    $region22: #{tpu_custom_call.1} parent=1 // pred_check
      _
    $region23: #{tpu_custom_call.1} parent=1 // pred_check_branch
      %237 = sbr.rel (0) target = $region25
    $region24: #{tpu_custom_call.1} parent=1 // pred_region
      %s239 = ssub.s32 256, 256
      %240 = vsyncadd [#allocation4], %s239
      %s241 = sshll.u32 [#allocation7], 4
      %s242 = int_to_ptr.vmem [resolvable:$true] %s241
      %247 = dma.vmem_to_hbm [thread:$0]  %s242, 256, %s3, [#allocation4], 128, 128, 8
    $region25: #{tpu_custom_call.1} parent=1 // pred_fallthru
      _
    // Predicated region
    $region26: #{tpu_custom_call.1} parent=1 // pred_check
      _
    $region27: #{tpu_custom_call.1} parent=1 // pred_check_branch
      %249 = sbr.rel (0) target = $region29
    $region28: #{tpu_custom_call.1} parent=1 // pred_region
      %250 = dma.done [#allocation4], 256
    $region29: #{tpu_custom_call.1} parent=1 // pred_fallthru
      _
    %251 = vsyncpa [#allocation3], 1
    %252 = vsyncpa [#allocation6], 1
    %253 = vsyncpa [#allocation4], 1

</llo_original>
